<compile_context>
chip_gen: v7x
topology: tpu7x:2x2x1
jax: 0.10.0
libtpu: 0.0.40
codegen_flags: <defaults>
</compile_context>

<pallas_src>
import jax
import jax.numpy as jnp
import numpy as np
from jax.experimental import pallas as pl
from jax.experimental.pallas import tpu as pltpu

_LANES = 128                      # vreg lane width
_SUBLANES = 8                     # f32 vreg sublane depth
_TARGET_BLOCK_BYTES = 2 << 20     # ~2 MiB per buffer (review: 2-4 MiB sweet spot)
_VMEM_LIMIT_BYTES = 32 << 20      # raise v5e's 16 MiB default; within v7x's 64 MiB


# ----------------------------------------------------------------------------
# Shape resolution (torch .view semantics, including a single -1)
# ----------------------------------------------------------------------------
def _resolve_shape(total, shape):
    shape = list(shape)
    if shape.count(-1) > 1:
        raise ValueError("only one dimension may be -1")
    if -1 in shape:
        known = 1
        for s in shape:
            if s != -1:
                known *= s
        if known == 0 or total % known != 0:
            raise ValueError(f"cannot view {total} elements as {shape}")
        shape[shape.index(-1)] = total // known
    else:
        prod = 1
        for s in shape:
            prod *= s
        if prod != total:
            raise ValueError(f"cannot view {total} elements as {shape}")
    return tuple(shape)


# ----------------------------------------------------------------------------
# Materialized copy, path 1: single HBM -> HBM DMA (no VMEM staging at all)
# ----------------------------------------------------------------------------
def _view_dma_kernel(x_hbm_ref, o_hbm_ref, sem):
    copy = pltpu.make_async_copy(x_hbm_ref, o_hbm_ref, sem)
    copy.start()
    copy.wait()


def _materialize_dma(x, out_shape):
    itemsize = np.dtype(x.dtype).itemsize
    # Metadata-only reshape so src/dst shapes match for the DMA descriptor.
    src = jnp.reshape(x, out_shape)
    return pl.pallas_call(
        _view_dma_kernel,
        out_shape=jax.ShapeDtypeStruct(out_shape, x.dtype),
        in_specs=[pl.BlockSpec(memory_space=pl.ANY)],
        out_specs=pl.BlockSpec(memory_space=pl.ANY),
        scratch_shapes=[pltpu.SemaphoreType.DMA],
        cost_estimate=pl.CostEstimate(
            flops=0, transcendentals=0,
            bytes_accessed=2 * x.size * itemsize),
    )(src)


# ----------------------------------------------------------------------------
# Materialized copy, path 2: tiled, double-buffered VMEM copy
# ----------------------------------------------------------------------------
def _view_copy_kernel(x_ref, o_ref):
    # Identity copy of one fully packed, lane-dense tile.
    o_ref[...] = x_ref[...]


def _choose_lanes(total):
    # Widest lane-dense last dim (multiple of 128) dividing the element count:
    # fewer grid rows, simpler divisor search, unmasked full-width stores.
    for lanes in (1024, 512, 256, 128):
        if total % lanes == 0:
            return lanes
    return None


def _pick_block_rows(rows, sub, target_rows):
    """Row-block that divides `rows`, is a multiple of the packed sublane
    height `sub`, stays near the bandwidth-optimal `target_rows`, and — when
    possible — yields >= 2 grid steps so both v7x TensorCores participate."""
    if rows <= sub:
        return rows                           # full extent (legal), one step
    cap = min(target_rows, rows // 2)         # >= 2 steps when rows >= 2*sub
    cap -= cap % sub
    for cand in range(cap, 0, -sub):
        if rows % cand == 0:
            return cand
    return None                               # awkward row count -> DMA path


def _materialize_tiled(x, out_shape):
    total = x.size
    dtype = x.dtype
    itemsize = np.dtype(dtype).itemsize

    lanes = _choose_lanes(total)
    if lanes is None:
        # Not lane-dense tileable; the DMA path handles any shape.
        return _materialize_dma(x, out_shape)

    rows = total // lanes
    # Dtype-aware packed tile height: 8 (f32), 16 (bf16), 32 (int8/fp8).
    sub = _SUBLANES * max(1, 4 // itemsize)
    target_rows = max(sub, _TARGET_BLOCK_BYTES // (lanes * itemsize))
    block_rows = _pick_block_rows(rows, sub, target_rows)
    if block_rows is None:
        return _materialize_dma(x, out_shape)

    flat = jnp.reshape(x, (rows, lanes))      # metadata-only
    grid = (rows // block_rows,)

    copied = pl.pallas_call(
        _view_copy_kernel,
        out_shape=jax.ShapeDtypeStruct((rows, lanes), dtype),
        grid_spec=pltpu.PrefetchScalarGridSpec(
            num_scalar_prefetch=0,
            grid=grid,
            in_specs=[pl.BlockSpec((block_rows, lanes), lambda i: (i, 0))],
            out_specs=pl.BlockSpec((block_rows, lanes), lambda i: (i, 0)),
        ),
        compiler_params=pltpu.CompilerParams(
            dimension_semantics=("parallel",),
            vmem_limit_bytes=_VMEM_LIMIT_BYTES,
        ),
        cost_estimate=pl.CostEstimate(
            flops=0, transcendentals=0,
            bytes_accessed=2 * total * itemsize),
    )(flat)

    return jnp.reshape(copied, out_shape)     # metadata-only re-label


# ----------------------------------------------------------------------------
# Public API (mirrors the PyTorch View module)
# ----------------------------------------------------------------------------
def pallas_view(x, shape, *, materialize=False, method="dma"):
    """Equivalent of torch.Tensor.view(*shape) for a contiguous array.

    By default this is metadata-only (no data movement), exactly like
    torch .view / jnp.reshape.  Set materialize=True to force an explicit
    copy through a Pallas kernel (method="dma" or "tiled")."""
    out_shape = _resolve_shape(x.size, shape)
    if not materialize:
        return jnp.reshape(x, out_shape)
    if method == "dma":
        return _materialize_dma(x, out_shape)
    if method == "tiled":
        return _materialize_tiled(x, out_shape)
    raise ValueError(f"unknown method: {method}")


class View:
    """Drop-in analog of the PyTorch View(nn.Module)."""

    def __init__(self, shape, *, materialize=False, method="dma"):
        self.shape = tuple(shape)
        self.materialize = materialize
        self.method = method

    def __call__(self, x):
        return pallas_view(x, self.shape, materialize=self.materialize,
                           method=self.method)


if __name__ == "__main__":
    key = jax.random.PRNGKey(0)
    # Small NCHW input consistent with the CNN usage: batch=2, C=4, H=W=16.
    x = jax.random.normal(key, (2, 4, 16, 16), dtype=jnp.float32)
    batch = x.shape[0]
    ref = jnp.reshape(x, (batch, -1))

    # 1) Default path: metadata-only view (the module's actual forward).
    view = View((batch, -1))
    y0 = jax.block_until_ready(view(x))
    assert y0.shape == (2, 4 * 16 * 16) and y0.dtype == x.dtype
    assert bool(jnp.array_equal(y0, ref))

    # 2) Materialized copy via a single HBM->HBM DMA Pallas kernel.
    y1 = jax.block_until_ready(
        pallas_view(x, (batch, -1), materialize=True, method="dma"))
    assert y1.shape == ref.shape and y1.dtype == x.dtype
    assert bool(jnp.array_equal(y1, ref))

    # 3) Materialized copy via the tiled VMEM kernel (multi-step grid so the
    #    "parallel" axis can shard across v7x's two TensorCores).
    x2 = jax.random.normal(jax.random.PRNGKey(0), (8, 8, 16, 16),
                           dtype=jnp.float32)
    ref2 = jnp.reshape(x2, (x2.shape[0], -1))
    y2 = jax.block_until_ready(
        pallas_view(x2, (x2.shape[0], -1), materialize=True, method="tiled"))
    assert y2.shape == ref2.shape and y2.dtype == x2.dtype
    assert bool(jnp.array_equal(y2, ref2))

    print("KERNEL_OK")
</pallas_src>

<mosaic_0001>
module attributes {stable_mosaic.version = 11 : i64} {
  func.func @_view_dma_kernel(%arg0: memref<2x1024xf32, #tpu.memory_space<any>>, %arg1: memref<2x1024xf32, #tpu.memory_space<any>>, %arg2: memref<!tpu.dma_semaphore, #tpu.memory_space<semaphore_mem>>) attributes {dimension_semantics = [], scalar_prefetch = 0 : i64, scratch_operands = 1 : i64, tpu.core_type = #tpu.core_type<tc>} {
    tpu.enqueue_dma source(%arg0 : memref<2x1024xf32, #tpu.memory_space<any>>) target(%arg1 : memref<2x1024xf32, #tpu.memory_space<any>>) target_semaphore(%arg2 : memref<!tpu.dma_semaphore, #tpu.memory_space<semaphore_mem>>)
    tpu.wait_dma2 semaphore(%arg2 : memref<!tpu.dma_semaphore, #tpu.memory_space<semaphore_mem>>) src(%arg0 : memref<2x1024xf32, #tpu.memory_space<any>>) dst(%arg1 : memref<2x1024xf32, #tpu.memory_space<any>>)
    return
  }
}

</mosaic_0001>

<llo_original>
// kernel: tpu_custom_call.1
$region0: #{tpu_custom_call.1}
  #allocation0 [shape = 'u32[]', space=smem, size = 0x4, offset = 0x4, fixed_abs, tag = 'smem constant byte address 0x4 - core index']
  #allocation1 [shape = 'u32[144,128]{1,0:T(1,128)}', space=vmem, size = 0x12000, scoped, tag = 'internal scratch']
  #allocation2 [shape = 's32[1]{0}', space=sflag, size = 0x4, scoped, tag = 'scratch operand']
  #allocation3 [shape = 's32[]', space=sflag, size = 0x4, offset = 0, fixed_abs, tag = 'sflag constant byte address 0x0 - dummy sync flag']
  #allocation4 [shape = 'u32[0]{0}', space=smem, size = 0, offset = 0, fixed_abs, tag = 'smem constant byte address 0x0 - null']
  %s0 = inlined_call_operand.hbm [shape: f32[2,1024], index: 0, kind: input, shape index: {}]
  %s1 = inlined_call_operand.hbm [shape: f32[2,1024], index: 1, kind: output, shape index: {}]
  %s2 = sld [smem:[#allocation0]]
  $region2: #{tpu_custom_call.1} parent=0
    _
  %s4 = ssub.s32 1, %s2
  %s5 = scalar_select 0, %s4, %s2
  %s7 = sshll.u32 1, 14
  %s8 = sxor.u32 4294967295, %s7
  %s11 = sshll.u32 3, 24
  %s12 = sxor.u32 4294967295, %s11
  %s13 = sand.u32 0, %s12
  %s15 = sor.u32 %s13, 0
  %18 = dma.general %s0, 256, %s1, [#allocation2], [#allocation3], [#allocation4], %s15, 0
  %s19 = smul.u32 2, 1
  %s20 = smul.u32 %s19, 8
  %s21 = sshll.u32 %s20, 4
  %22 = dma.done [#allocation2], %s21
  %23 = vsyncmov [#allocation2]
  %s24 = vpop.sfrf %23
  %p25 = scmp.eq.s32.totalorder %s24, 0
  %p26 = pneg %p25
  %28 = shalt.err (%p26)

</llo_original>
